<compile_context>
chip_gen: v7x
topology: tpu7x:2x2x1
jax: 0.10.0
libtpu: 0.0.40
codegen_flags: <defaults>
</compile_context>

<pallas_src>
import functools

import jax
import jax.numpy as jnp
from jax.experimental import pallas as pl
from jax.experimental.pallas import tpu as pltpu

_PARAM_HAT_KEYS = ("sti_hat", "tr_hat", "edt_hat", "c80_hat", "d50_hat", "ts_hat")
_PARAM_GT_KEYS = ("sti", "tr", "edt", "c80", "d50", "ts")
_PARAM_NAMES = ("sti", "tr", "edt", "c80", "d50", "ts")
_NUM_PARAMS = 6

# Fixed conv stack used only to compute output lengths: (dim, kernel, stride, pad)
_ROOM_PARAMETRIC_PREDICTOR_LAYERS = [(384, 3, 1, 1), (384, 3, 1, 1),
                                     (384, 5, 3, 0), (384, 3, 1, 1)]


def _get_param_pred_output_lengths(input_lengths):
    """Mirror of the PyTorch conv output-length computation (floor formula)."""
    lengths = input_lengths.astype(jnp.float32)
    for (_, k, s, p) in _ROOM_PARAMETRIC_PREDICTOR_LAYERS:
        lengths = jnp.floor((lengths + 2 * p - (k - 1) - 1) / s + 1)
    return lengths.astype(jnp.int32)


def _eval_kernel(len_ref, hat_ref, gt_ref, loss_ref, corr_ref):
    """Masked temporal pooling + L1 loss + |Pearson corr| for all 6 params.

    len_ref : VMEM [B, 1]    effective valid frame count per row (f32, <= T)
    hat_ref : VMEM [6, B, T] predicted per-frame params
    gt_ref  : VMEM [6, B]    per-utterance ground truth
    loss_ref: VMEM [6, 1]    L1 loss per param
    corr_ref: VMEM [6, 1]    |Pearson corr| per param
    """
    B = len_ref.shape[0]
    T = hat_ref.shape[2]

    lens = len_ref[...]                                              # [B, 1]
    # Build the valid-frame mask in-kernel (no HBM mask materialization).
    iota_t = jax.lax.broadcasted_iota(jnp.int32, (B, T), 1).astype(jnp.float32)
    mask = (iota_t < lens).astype(jnp.float32)                       # [B, T]
    # Fold the 1/len normalization into the mask: one divide total.
    # NOTE: matches the reference NaN behavior when a row has 0 valid frames.
    w = mask * (1.0 / lens)                                          # [B, T]

    # Masked temporal mean for all 6 params at once: lane reduce over T.
    pooled = jnp.sum(hat_ref[...] * w[None, :, :], axis=2)           # [6, B]
    g = gt_ref[...]                                                  # [6, B]

    # L1 loss per param (mean abs error over the batch).
    loss_ref[...] = jnp.mean(jnp.abs(pooled - g), axis=1, keepdims=True)   # [6,1]

    # |Pearson correlation| per param.
    dx = pooled - jnp.mean(pooled, axis=1, keepdims=True)            # [6, B]
    dy = g - jnp.mean(g, axis=1, keepdims=True)                      # [6, B]
    cov = jnp.sum(dx * dy, axis=1, keepdims=True)                    # [6, 1]
    var_prod = (jnp.sum(dx * dx, axis=1, keepdims=True) *
                jnp.sum(dy * dy, axis=1, keepdims=True))             # [6, 1]
    corr_ref[...] = jnp.abs(cov * jax.lax.rsqrt(var_prod))           # [6, 1]


def _run_eval_kernel(hats, gts, eff_len):
    """hats [6,B,T] f32, gts [6,B] f32, eff_len [B,1] f32 -> (losses[6], corrs[6])."""
    losses, corrs = pl.pallas_call(
        _eval_kernel,
        out_shape=(
            jax.ShapeDtypeStruct((_NUM_PARAMS, 1), jnp.float32),
            jax.ShapeDtypeStruct((_NUM_PARAMS, 1), jnp.float32),
        ),
        in_specs=[
            pl.BlockSpec(memory_space=pltpu.MemorySpace.VMEM),
            pl.BlockSpec(memory_space=pltpu.MemorySpace.VMEM),
            pl.BlockSpec(memory_space=pltpu.MemorySpace.VMEM),
        ],
        out_specs=(
            pl.BlockSpec(memory_space=pltpu.MemorySpace.VMEM),
            pl.BlockSpec(memory_space=pltpu.MemorySpace.VMEM),
        ),
    )(eff_len, hats, gts)
    return losses[:, 0], corrs[:, 0]


def _pack_outputs(losses, corrs):
    out = {}
    for i, name in enumerate(_PARAM_NAMES):
        out[f"loss_{name}"] = losses[i]
        out[f"corr_{name}"] = corrs[i]
    return out


def _stack_inputs(hat_tuple, gt_tuple):
    hats = jnp.stack([h.astype(jnp.float32) for h in hat_tuple], axis=0)  # [6,B,T]
    gts = jnp.stack([g.astype(jnp.float32) for g in gt_tuple], axis=0)    # [6,B]
    return hats, gts


@jax.jit
def _forward_masked(hat_tuple, gt_tuple, padding_mask):
    """padding_mask is a [B, T_in] bool array (may contain no True values)."""
    hats, gts = _stack_inputs(hat_tuple, gt_tuple)
    B, T = hats.shape[1], hats.shape[2]
    input_lengths = jnp.sum(1 - padding_mask.astype(jnp.int32), axis=-1)      # [B]
    out_lens = _get_param_pred_output_lengths(input_lengths)                  # [B]
    has_pad = jnp.any(padding_mask)
    # If nothing is padded, the reference takes a plain mean over all T frames.
    eff_len = jnp.where(has_pad,
                        jnp.minimum(out_lens, jnp.int32(T)),
                        jnp.int32(T)).astype(jnp.float32)                     # [B]
    losses, corrs = _run_eval_kernel(hats, gts, eff_len[:, None])
    return _pack_outputs(losses, corrs)


@jax.jit
def _forward_unmasked(hat_tuple, gt_tuple):
    hats, gts = _stack_inputs(hat_tuple, gt_tuple)
    B, T = hats.shape[1], hats.shape[2]
    eff_len = jnp.full((B, 1), float(T), dtype=jnp.float32)
    losses, corrs = _run_eval_kernel(hats, gts, eff_len)
    return _pack_outputs(losses, corrs)


def rp_joint_estimation_evaluation(param_hat, param_groundtruth):
    """JAX/Pallas equivalent of RPJointEstimationEvaluation.forward (dim()==2 case)."""
    hat_tuple = tuple(param_hat[k] for k in _PARAM_HAT_KEYS)
    gt_tuple = tuple(param_groundtruth[k] for k in _PARAM_GT_KEYS)
    padding_mask = param_hat.get("padding_mask", None)

    assert hat_tuple[0].ndim == 2, "kernel implements the dim()==2 branch"
    # TODO(synk): dim()==1 branch (single-utterance scalar mean) not implemented.

    if padding_mask is not None:
        return _forward_masked(hat_tuple, gt_tuple, padding_mask)
    return _forward_unmasked(hat_tuple, gt_tuple)


# --------------------------------------------------------------------------
# Pure-JAX reference (mirrors the PyTorch module) used for the self-check.
# --------------------------------------------------------------------------
def _reference_jax(param_hat, param_groundtruth):
    padding_mask = param_hat.get("padding_mask", None)
    B, T = param_hat["sti_hat"].shape
    if padding_mask is not None and bool(jnp.any(padding_mask)):
        input_lengths = jnp.sum(1 - padding_mask.astype(jnp.int32), axis=-1)
        out_lens = _get_param_pred_output_lengths(input_lengths)
        rmask = (jnp.arange(T)[None, :] < out_lens[:, None]).astype(jnp.float32)
    else:
        rmask = jnp.ones((B, T), dtype=jnp.float32)

    out = {}
    for name in _PARAM_NAMES:
        h = param_hat[f"{name}_hat"].astype(jnp.float32)
        g = param_groundtruth[name].astype(jnp.float32)
        pooled = jnp.sum(h * rmask, axis=1) / jnp.sum(rmask, axis=1)
        out[f"loss_{name}"] = jnp.mean(jnp.abs(pooled - g))
        dx = pooled - jnp.mean(pooled)
        dy = g - jnp.mean(g)
        out[f"corr_{name}"] = jnp.abs(
            jnp.sum(dx * dy) / jnp.sqrt(jnp.sum(dx * dx) * jnp.sum(dy * dy))
        )
    return out


def _check(result, ref):
    for k in result:
        assert jnp.allclose(result[k], ref[k], atol=1e-5, rtol=1e-5), (
            k, result[k], ref[k]
        )


if __name__ == "__main__":
    key = jax.random.PRNGKey(0)
    B, T_in, T = 8, 48, 16  # T = conv-output-length upper bound for T_in=48

    keys = jax.random.split(key, 2 * _NUM_PARAMS)
    param_hat = {}
    param_gt = {}
    for i, name in enumerate(_PARAM_NAMES):
        param_hat[f"{name}_hat"] = jax.random.normal(keys[i], (B, T), dtype=jnp.float32)
        param_gt[name] = jax.random.normal(keys[_NUM_PARAMS + i], (B,), dtype=jnp.float32)

    # Case 1: padded input (row b has 3*b padded pre-conv frames).
    frame_idx = jnp.arange(T_in)[None, :]
    valid_lens = T_in - 3 * jnp.arange(B)
    param_hat["padding_mask"] = frame_idx >= valid_lens[:, None]   # bool [B, T_in]
    res1 = rp_joint_estimation_evaluation(param_hat, param_gt)
    res1 = jax.tree_util.tree_map(jax.block_until_ready, res1)
    _check(res1, _reference_jax(param_hat, param_gt))

    # Case 2: padding mask present but all False -> plain mean over all T frames.
    param_hat["padding_mask"] = jnp.zeros((B, T_in), dtype=bool)
    res2 = rp_joint_estimation_evaluation(param_hat, param_gt)
    res2 = jax.tree_util.tree_map(jax.block_until_ready, res2)
    _check(res2, _reference_jax(param_hat, param_gt))

    # Case 3: padding mask is None -> plain mean over all T frames.
    param_hat["padding_mask"] = None
    res3 = rp_joint_estimation_evaluation(param_hat, param_gt)
    res3 = jax.tree_util.tree_map(jax.block_until_ready, res3)
    _check(res3, _reference_jax(param_hat, param_gt))

    print("KERNEL_OK")
</pallas_src>

<mosaic_0001>
module attributes {stable_mosaic.version = 11 : i64} {
  func.func @_eval_kernel(%arg0: memref<8x1xf32, #tpu.memory_space<vmem>>, %arg1: memref<6x8x16xf32, #tpu.memory_space<vmem>>, %arg2: memref<6x8xf32, #tpu.memory_space<vmem>>, %arg3: memref<6x1xf32, #tpu.memory_space<vmem>>, %arg4: memref<6x1xf32, #tpu.memory_space<vmem>>) attributes {dimension_semantics = [], scalar_prefetch = 0 : i64, scratch_operands = 0 : i64, tpu.core_type = #tpu.core_type<tc>} {
    %c0 = arith.constant 0 : index
    %c0_0 = arith.constant 0 : index
    %0 = vector.load %arg0[%c0, %c0_0] : memref<8x1xf32, #tpu.memory_space<vmem>>, vector<8x1xf32>
    %1 = tpu.iota {dimensions = array<i32: 1>} : vector<8x16xi32>
    %2 = arith.sitofp %1 : vector<8x16xi32> to vector<8x16xf32>
    %3 = vector.broadcast %0 : vector<8x1xf32> to vector<8x16xf32>
    %4 = arith.cmpf olt, %2, %3 : vector<8x16xf32>
    %5 = arith.extui %4 : vector<8x16xi1> to vector<8x16xi32>
    %6 = arith.sitofp %5 : vector<8x16xi32> to vector<8x16xf32>
    %cst = arith.constant 1.000000e+00 : f32
    %7 = vector.broadcast %cst : f32 to vector<8x1xf32>
    %8 = arith.divf %7, %0 : vector<8x1xf32>
    %9 = vector.broadcast %8 : vector<8x1xf32> to vector<8x16xf32>
    %10 = arith.mulf %6, %9 : vector<8x16xf32>
    %c0_1 = arith.constant 0 : index
    %c0_2 = arith.constant 0 : index
    %c0_3 = arith.constant 0 : index
    %11 = vector.load %arg1[%c0_1, %c0_2, %c0_3] : memref<6x8x16xf32, #tpu.memory_space<vmem>>, vector<6x8x16xf32>
    %12 = vector.shape_cast %10 : vector<8x16xf32> to vector<1x8x16xf32>
    %13 = vector.broadcast %12 : vector<1x8x16xf32> to vector<6x8x16xf32>
    %14 = arith.mulf %11, %13 : vector<6x8x16xf32>
    %cst_4 = arith.constant dense<0.000000e+00> : vector<6x8xf32>
    %15 = vector.multi_reduction <add>, %14, %cst_4 [2] : vector<6x8x16xf32> to vector<6x8xf32>
    %c0_5 = arith.constant 0 : index
    %c0_6 = arith.constant 0 : index
    %16 = vector.load %arg2[%c0_5, %c0_6] : memref<6x8xf32, #tpu.memory_space<vmem>>, vector<6x8xf32>
    %17 = arith.subf %15, %16 : vector<6x8xf32>
    %18 = math.absf %17 : vector<6x8xf32>
    %cst_7 = arith.constant dense<0.000000e+00> : vector<6xf32>
    %19 = vector.multi_reduction <add>, %18, %cst_7 [1] : vector<6x8xf32> to vector<6xf32>
    %20 = vector.shape_cast %19 : vector<6xf32> to vector<6x1xf32>
    %cst_8 = arith.constant 8.000000e+00 : f32
    %21 = vector.broadcast %cst_8 : f32 to vector<6x1xf32>
    %22 = arith.divf %20, %21 : vector<6x1xf32>
    %c0_9 = arith.constant 0 : index
    %c0_10 = arith.constant 0 : index
    %23 = vector.load %arg3[%c0_9, %c0_10] : memref<6x1xf32, #tpu.memory_space<vmem>>, vector<6x1xf32>
    tpu.vector_store %arg3[%c0_9, %c0_10], %22 {strides = array<i32>} : memref<6x1xf32, #tpu.memory_space<vmem>>, vector<6x1xf32>,
    %cst_11 = arith.constant dense<0.000000e+00> : vector<6xf32>
    %24 = vector.multi_reduction <add>, %15, %cst_11 [1] : vector<6x8xf32> to vector<6xf32>
    %25 = vector.shape_cast %24 : vector<6xf32> to vector<6x1xf32>
    %cst_12 = arith.constant 8.000000e+00 : f32
    %26 = vector.broadcast %cst_12 : f32 to vector<6x1xf32>
    %27 = arith.divf %25, %26 : vector<6x1xf32>
    %28 = vector.broadcast %27 : vector<6x1xf32> to vector<6x8xf32>
    %29 = arith.subf %15, %28 : vector<6x8xf32>
    %cst_13 = arith.constant dense<0.000000e+00> : vector<6xf32>
    %30 = vector.multi_reduction <add>, %16, %cst_13 [1] : vector<6x8xf32> to vector<6xf32>
    %31 = vector.shape_cast %30 : vector<6xf32> to vector<6x1xf32>
    %cst_14 = arith.constant 8.000000e+00 : f32
    %32 = vector.broadcast %cst_14 : f32 to vector<6x1xf32>
    %33 = arith.divf %31, %32 : vector<6x1xf32>
    %34 = vector.broadcast %33 : vector<6x1xf32> to vector<6x8xf32>
    %35 = arith.subf %16, %34 : vector<6x8xf32>
    %36 = arith.mulf %29, %35 : vector<6x8xf32>
    %cst_15 = arith.constant dense<0.000000e+00> : vector<6xf32>
    %37 = vector.multi_reduction <add>, %36, %cst_15 [1] : vector<6x8xf32> to vector<6xf32>
    %38 = vector.shape_cast %37 : vector<6xf32> to vector<6x1xf32>
    %39 = arith.mulf %29, %29 : vector<6x8xf32>
    %cst_16 = arith.constant dense<0.000000e+00> : vector<6xf32>
    %40 = vector.multi_reduction <add>, %39, %cst_16 [1] : vector<6x8xf32> to vector<6xf32>
    %41 = vector.shape_cast %40 : vector<6xf32> to vector<6x1xf32>
    %42 = arith.mulf %35, %35 : vector<6x8xf32>
    %cst_17 = arith.constant dense<0.000000e+00> : vector<6xf32>
    %43 = vector.multi_reduction <add>, %42, %cst_17 [1] : vector<6x8xf32> to vector<6xf32>
    %44 = vector.shape_cast %43 : vector<6xf32> to vector<6x1xf32>
    %45 = arith.mulf %41, %44 : vector<6x1xf32>
    %46 = math.rsqrt %45 : vector<6x1xf32>
    %47 = arith.mulf %38, %46 : vector<6x1xf32>
    %48 = math.absf %47 : vector<6x1xf32>
    %c0_18 = arith.constant 0 : index
    %c0_19 = arith.constant 0 : index
    %49 = vector.load %arg4[%c0_18, %c0_19] : memref<6x1xf32, #tpu.memory_space<vmem>>, vector<6x1xf32>
    tpu.vector_store %arg4[%c0_18, %c0_19], %48 {strides = array<i32>} : memref<6x1xf32, #tpu.memory_space<vmem>>, vector<6x1xf32>,
    return
  }
}

</mosaic_0001>

<llo_original>
// kernel: _forward_masked.1
$region0: #{_forward_masked.1}
  #allocation0 [shape = 'u32[]', space=smem, size = 0x4, offset = 0x4, fixed_abs, tag = 'smem constant byte address 0x4 - core index']
  #allocation1 [shape = 'u32[144,128]{1,0:T(1,128)}', space=vmem, size = 0x12000, scoped, tag = 'internal scratch']
  %s0 = inlined_call_operand.vmem [shape: f32[8,1], index: 0, kind: input, shape index: {}]
  %s1 = inlined_call_operand.vmem [shape: f32[6,8,16], index: 1, kind: input, shape index: {}]
  %s2 = inlined_call_operand.vmem [shape: f32[6,8], index: 2, kind: input, shape index: {}]
  %s3 = inlined_call_operand.vmem [shape: f32[6,1], index: 3, kind: output, shape index: {0}]
  %s4 = inlined_call_operand.vmem [shape: f32[6,1], index: 4, kind: output, shape index: {1}]
  %5 = xla_tuple %s3, %s4
  %s6 = sld [smem:[#allocation0]]
  $region30: #{_forward_masked.1} parent=0
    _
  %s8 = ssub.s32 1, %s6
  %s9 = scalar_select 0, %s8, %s6
  // Predicated region
  $region2: #{_forward_masked.1} parent=0 // pred_check
    _
  $region3: #{_forward_masked.1} parent=0 // pred_check_branch
    %11 = sbr.rel (0) target = $region5
  $region4: #{_forward_masked.1} parent=0 // pred_region
    _
  $region5: #{_forward_masked.1} parent=0 // pred_fallthru
    _
  // Predicated region
  $region6: #{_forward_masked.1} parent=0 // pred_check
    _
  $region7: #{_forward_masked.1} parent=0 // pred_check_branch
    %13 = sbr.rel (0) target = $region9
  $region8: #{_forward_masked.1} parent=0 // pred_region
    _
  $region9: #{_forward_masked.1} parent=0 // pred_fallthru
    _
  // Predicated region
  $region10: #{_forward_masked.1} parent=0 // pred_check
    _
  $region11: #{_forward_masked.1} parent=0 // pred_check_branch
    %15 = sbr.rel (0) target = $region13
  $region12: #{_forward_masked.1} parent=0 // pred_region
    _
  $region13: #{_forward_masked.1} parent=0 // pred_fallthru
    _
  %v16 = vld [vmem:[%s0] sm:$0xff]
  %v17 = vlaneseq
  %v18 = vand.u32 %v17, 127
  %v19 = vcvt.s32.f32 %v18
  %21 = vset.pattern.permute.xlu0 0
  %22 = vperm.xlu0 %21, %v16
  %v23 = vpop.permute.xlu0 %22
  %vm25 = vcmp.lt.f32.partialorder %v19, %v23
  %v26 = vsel %vm25, 1, 0
  %v27 = vcvt.s32.f32 %v26
  %v28 = vrcp.pop %v16
  %v29 = vmul.f32 1.0, %v28
  %31 = vset.pattern.permute.xlu0 0
  %32 = vperm.xlu0 %31, %v29
  %v33 = vpop.permute.xlu0 %32
  %v35 = vmul.f32 %v27, %v33
  %v36 = vld [vmem:[%s1] sm:$0xff]
  %v37 = vld [vmem:[%s1 + $0x8] sm:$0xff]
  %v38 = vld [vmem:[%s1 + $0x10] sm:$0xff]
  %v39 = vld [vmem:[%s1 + $0x18] sm:$0xff]
  %v40 = vld [vmem:[%s1 + $0x20] sm:$0xff]
  %v41 = vld [vmem:[%s1 + $0x28] sm:$0xff]
  %v42 = vmul.f32 %v36, %v35
  %v43 = vmul.f32 %v37, %v35
  %v44 = vmul.f32 %v38, %v35
  %v45 = vmul.f32 %v39, %v35
  %v46 = vmul.f32 %v40, %v35
  %v47 = vmul.f32 %v41, %v35
  %vm48 = vcmask 130048
  %v49 = vsel %vm48, %v42, 0.0
  %50 = vadd.xlane.f32.xlu0 %v49
  %v51 = vpop.xlane.xlu0 %50
  %v52 = vsel %vm48, %v43, 0.0
  %53 = vadd.xlane.f32.xlu0 %v52
  %v54 = vpop.xlane.xlu0 %53
  %v55 = vsel %vm48, %v44, 0.0
  %56 = vadd.xlane.f32.xlu0 %v55
  %v57 = vpop.xlane.xlu0 %56
  %v58 = vsel %vm48, %v45, 0.0
  %59 = vadd.xlane.f32.xlu0 %v58
  %v60 = vpop.xlane.xlu0 %59
  %v61 = vsel %vm48, %v46, 0.0
  %62 = vadd.xlane.f32.xlu0 %v61
  %v63 = vpop.xlane.xlu0 %62
  %v64 = vsel %vm48, %v47, 0.0
  %65 = vadd.xlane.f32.xlu0 %v64
  %v66 = vpop.xlane.xlu0 %65
  %v67 = vld [vmem:[%s2] sm:$0x3f]
  %v69 = vlaneseq
  %v70 = vshrl.u32 %v69, 7
  %v71 = vsub.s32 0, %v70
  %v72 = vrot.slane %v67, %v71
  %74 = vbcast.lane.b32.xlu0 %v72, 256
  %v75 = vpop.permute.xlu0 %74
  %v76 = vlaneseq
  %v77 = vshrl.u32 %v76, 7
  %v78 = vsub.s32 1, %v77
  %v79 = vrot.slane %v67, %v78
  %81 = vbcast.lane.b32.xlu0 %v79, 256
  %v82 = vpop.permute.xlu0 %81
  %v83 = vlaneseq
  %v84 = vshrl.u32 %v83, 7
  %v85 = vsub.s32 2, %v84
  %v86 = vrot.slane %v67, %v85
  %88 = vbcast.lane.b32.xlu0 %v86, 256
  %v89 = vpop.permute.xlu0 %88
  %v90 = vlaneseq
  %v91 = vshrl.u32 %v90, 7
  %v92 = vsub.s32 3, %v91
  %v93 = vrot.slane %v67, %v92
  %95 = vbcast.lane.b32.xlu0 %v93, 256
  %v96 = vpop.permute.xlu0 %95
  %v97 = vlaneseq
  %v98 = vshrl.u32 %v97, 7
  %v99 = vsub.s32 4, %v98
  %v100 = vrot.slane %v67, %v99
  %102 = vbcast.lane.b32.xlu0 %v100, 256
  %v103 = vpop.permute.xlu0 %102
  %v104 = vlaneseq
  %v105 = vshrl.u32 %v104, 7
  %v106 = vsub.s32 5, %v105
  %v107 = vrot.slane %v67, %v106
  %109 = vbcast.lane.b32.xlu0 %v107, 256
  %v110 = vpop.permute.xlu0 %109
  %v117 = vsub.f32 %v51, %v75
  %v118 = vsub.f32 %v54, %v82
  %v119 = vsub.f32 %v57, %v89
  %v120 = vsub.f32 %v60, %v96
  %v121 = vsub.f32 %v63, %v103
  %v122 = vsub.f32 %v66, %v110
  %v123 = vand.u32 2147483647, %v117
  %v124 = vand.u32 2147483647, %v118
  %v125 = vand.u32 2147483647, %v119
  %v126 = vand.u32 2147483647, %v120
  %v127 = vand.u32 2147483647, %v121
  %v128 = vand.u32 2147483647, %v122
  %135 = vset.pattern.permute.xlu0 0
  %136 = vperm.xlu0 %135, %v123
  %v137 = vpop.permute.xlu0 %136
  %138 = vset.pattern.permute.xlu0 0
  %139 = vperm.xlu0 %138, %v124
  %v140 = vpop.permute.xlu0 %139
  %141 = vset.pattern.permute.xlu0 0
  %142 = vperm.xlu0 %141, %v125
  %v143 = vpop.permute.xlu0 %142
  %144 = vset.pattern.permute.xlu0 0
  %145 = vperm.xlu0 %144, %v126
  %v146 = vpop.permute.xlu0 %145
  %147 = vset.pattern.permute.xlu0 0
  %148 = vperm.xlu0 %147, %v127
  %v149 = vpop.permute.xlu0 %148
  %150 = vset.pattern.permute.xlu0 0
  %151 = vperm.xlu0 %150, %v128
  %v152 = vpop.permute.xlu0 %151
  %v153 = vlaneseq
  %v154 = vshrl.u32 %v153, 7
  %v155 = vsub.s32 %v18, %v154
  %v156 = vrot.slane %v137, %v155
  %v157 = vlaneseq
  %v158 = vshrl.u32 %v157, 7
  %v159 = vsub.s32 %v18, %v158
  %v160 = vrot.slane %v140, %v159
  %v161 = vlaneseq
  %v162 = vshrl.u32 %v161, 7
  %v163 = vsub.s32 %v18, %v162
  %v164 = vrot.slane %v143, %v163
  %v165 = vlaneseq
  %v166 = vshrl.u32 %v165, 7
  %v167 = vsub.s32 %v18, %v166
  %v168 = vrot.slane %v146, %v167
  %v169 = vlaneseq
  %v170 = vshrl.u32 %v169, 7
  %v171 = vsub.s32 %v18, %v170
  %v172 = vrot.slane %v149, %v171
  %v173 = vlaneseq
  %v174 = vshrl.u32 %v173, 7
  %v175 = vsub.s32 %v18, %v174
  %v176 = vrot.slane %v152, %v175
  %vm177 = vcmask 1041409
  %v178 = vsel %vm177, %v160, %v156
  %vm179 = vcmask 1042434
  %v180 = vsel %vm179, %v164, %v178
  %vm181 = vcmask 1043459
  %v182 = vsel %vm181, %v168, %v180
  %vm183 = vcmask 1044484
  %v184 = vsel %vm183, %v172, %v182
  %vm185 = vcmask 1045509
  %v186 = vsel %vm185, %v176, %v184
  %vm188 = vcmask 62464
  %v189 = vsel %vm188, %v186, 0.0
  %190 = vadd.xlane.f32.xlu0 %v189
  %v191 = vpop.xlane.xlu0 %190
  %v192 = vrcp.pop 8.0
  %v193 = vmul.f32 %v191, %v192
  %vm194 = vcmask 5120
  %195 = vst.msk [vmem:[%s3] sm:$0x3f] %vm194, %v193
  %v202 = vlaneseq
  %v203 = vshrl.u32 %v202, 7
  %v204 = vsub.s32 %v18, %v203
  %v205 = vrot.slane %v51, %v204
  %v206 = vlaneseq
  %v207 = vshrl.u32 %v206, 7
  %v208 = vsub.s32 %v18, %v207
  %v209 = vrot.slane %v54, %v208
  %v210 = vlaneseq
  %v211 = vshrl.u32 %v210, 7
  %v212 = vsub.s32 %v18, %v211
  %v213 = vrot.slane %v57, %v212
  %v214 = vlaneseq
  %v215 = vshrl.u32 %v214, 7
  %v216 = vsub.s32 %v18, %v215
  %v217 = vrot.slane %v60, %v216
  %v218 = vlaneseq
  %v219 = vshrl.u32 %v218, 7
  %v220 = vsub.s32 %v18, %v219
  %v221 = vrot.slane %v63, %v220
  %v222 = vlaneseq
  %v223 = vshrl.u32 %v222, 7
  %v224 = vsub.s32 %v18, %v223
  %v225 = vrot.slane %v66, %v224
  %v226 = vsel %vm177, %v209, %v205
  %v227 = vsel %vm179, %v213, %v226
  %v228 = vsel %vm181, %v217, %v227
  %v229 = vsel %vm183, %v221, %v228
  %v230 = vsel %vm185, %v225, %v229
  %v232 = vsel %vm188, %v230, 0.0
  %233 = vadd.xlane.f32.xlu0 %v232
  %v234 = vpop.xlane.xlu0 %233
  %v235 = vmul.f32 %v234, %v192
  %v237 = vlaneseq
  %v238 = vshrl.u32 %v237, 7
  %v239 = vsub.s32 0, %v238
  %v240 = vrot.slane %v235, %v239
  %v241 = vlaneseq
  %v242 = vshrl.u32 %v241, 7
  %v243 = vsub.s32 1, %v242
  %v244 = vrot.slane %v235, %v243
  %v245 = vlaneseq
  %v246 = vshrl.u32 %v245, 7
  %v247 = vsub.s32 2, %v246
  %v248 = vrot.slane %v235, %v247
  %v249 = vlaneseq
  %v250 = vshrl.u32 %v249, 7
  %v251 = vsub.s32 3, %v250
  %v252 = vrot.slane %v235, %v251
  %v253 = vlaneseq
  %v254 = vshrl.u32 %v253, 7
  %v255 = vsub.s32 4, %v254
  %v256 = vrot.slane %v235, %v255
  %v257 = vlaneseq
  %v258 = vshrl.u32 %v257, 7
  %v259 = vsub.s32 5, %v258
  %v260 = vrot.slane %v235, %v259
  %v267 = vsub.f32 %v51, %v240
  %v268 = vsub.f32 %v54, %v244
  %v269 = vsub.f32 %v57, %v248
  %v270 = vsub.f32 %v60, %v252
  %v271 = vsub.f32 %v63, %v256
  %v272 = vsub.f32 %v66, %v260
  %v273 = vsel %vm188, %v67, 0.0
  %274 = vadd.xlane.f32.xlu0 %v273
  %v275 = vpop.xlane.xlu0 %274
  %v276 = vmul.f32 %v275, %v192
  %v277 = vsub.f32 %v67, %v276
  %v279 = vlaneseq
  %v280 = vshrl.u32 %v279, 7
  %v281 = vsub.s32 0, %v280
  %v282 = vrot.slane %v277, %v281
  %284 = vbcast.lane.b32.xlu0 %v282, 256
  %v285 = vpop.permute.xlu0 %284
  %v286 = vlaneseq
  %v287 = vshrl.u32 %v286, 7
  %v288 = vsub.s32 1, %v287
  %v289 = vrot.slane %v277, %v288
  %291 = vbcast.lane.b32.xlu0 %v289, 256
  %v292 = vpop.permute.xlu0 %291
  %v293 = vlaneseq
  %v294 = vshrl.u32 %v293, 7
  %v295 = vsub.s32 2, %v294
  %v296 = vrot.slane %v277, %v295
  %298 = vbcast.lane.b32.xlu0 %v296, 256
  %v299 = vpop.permute.xlu0 %298
  %v300 = vlaneseq
  %v301 = vshrl.u32 %v300, 7
  %v302 = vsub.s32 3, %v301
  %v303 = vrot.slane %v277, %v302
  %305 = vbcast.lane.b32.xlu0 %v303, 256
  %v306 = vpop.permute.xlu0 %305
  %v307 = vlaneseq
  %v308 = vshrl.u32 %v307, 7
  %v309 = vsub.s32 4, %v308
  %v310 = vrot.slane %v277, %v309
  %312 = vbcast.lane.b32.xlu0 %v310, 256
  %v313 = vpop.permute.xlu0 %312
  %v314 = vlaneseq
  %v315 = vshrl.u32 %v314, 7
  %v316 = vsub.s32 5, %v315
  %v317 = vrot.slane %v277, %v316
  %319 = vbcast.lane.b32.xlu0 %v317, 256
  %v320 = vpop.permute.xlu0 %319
  %v327 = vmul.f32 %v267, %v285
  %v328 = vmul.f32 %v268, %v292
  %v329 = vmul.f32 %v269, %v299
  %v330 = vmul.f32 %v270, %v306
  %v331 = vmul.f32 %v271, %v313
  %v332 = vmul.f32 %v272, %v320
  %339 = vset.pattern.permute.xlu0 0
  %340 = vperm.xlu0 %339, %v327
  %v341 = vpop.permute.xlu0 %340
  %342 = vset.pattern.permute.xlu0 0
  %343 = vperm.xlu0 %342, %v328
  %v344 = vpop.permute.xlu0 %343
  %345 = vset.pattern.permute.xlu0 0
  %346 = vperm.xlu0 %345, %v329
  %v347 = vpop.permute.xlu0 %346
  %348 = vset.pattern.permute.xlu0 0
  %349 = vperm.xlu0 %348, %v330
  %v350 = vpop.permute.xlu0 %349
  %351 = vset.pattern.permute.xlu0 0
  %352 = vperm.xlu0 %351, %v331
  %v353 = vpop.permute.xlu0 %352
  %354 = vset.pattern.permute.xlu0 0
  %355 = vperm.xlu0 %354, %v332
  %v356 = vpop.permute.xlu0 %355
  %v357 = vlaneseq
  %v358 = vshrl.u32 %v357, 7
  %v359 = vsub.s32 %v18, %v358
  %v360 = vrot.slane %v341, %v359
  %v361 = vlaneseq
  %v362 = vshrl.u32 %v361, 7
  %v363 = vsub.s32 %v18, %v362
  %v364 = vrot.slane %v344, %v363
  %v365 = vlaneseq
  %v366 = vshrl.u32 %v365, 7
  %v367 = vsub.s32 %v18, %v366
  %v368 = vrot.slane %v347, %v367
  %v369 = vlaneseq
  %v370 = vshrl.u32 %v369, 7
  %v371 = vsub.s32 %v18, %v370
  %v372 = vrot.slane %v350, %v371
  %v373 = vlaneseq
  %v374 = vshrl.u32 %v373, 7
  %v375 = vsub.s32 %v18, %v374
  %v376 = vrot.slane %v353, %v375
  %v377 = vlaneseq
  %v378 = vshrl.u32 %v377, 7
  %v379 = vsub.s32 %v18, %v378
  %v380 = vrot.slane %v356, %v379
  %v381 = vsel %vm177, %v364, %v360
  %v382 = vsel %vm179, %v368, %v381
  %v383 = vsel %vm181, %v372, %v382
  %v384 = vsel %vm183, %v376, %v383
  %v385 = vsel %vm185, %v380, %v384
  %v387 = vsel %vm188, %v385, 0.0
  %388 = vadd.xlane.f32.xlu0 %v387
  %v389 = vpop.xlane.xlu0 %388
  %v390 = vmul.f32 %v267, %v267
  %v391 = vmul.f32 %v268, %v268
  %v392 = vmul.f32 %v269, %v269
  %v393 = vmul.f32 %v270, %v270
  %v394 = vmul.f32 %v271, %v271
  %v395 = vmul.f32 %v272, %v272
  %402 = vset.pattern.permute.xlu0 0
  %403 = vperm.xlu0 %402, %v390
  %v404 = vpop.permute.xlu0 %403
  %405 = vset.pattern.permute.xlu0 0
  %406 = vperm.xlu0 %405, %v391
  %v407 = vpop.permute.xlu0 %406
  %408 = vset.pattern.permute.xlu0 0
  %409 = vperm.xlu0 %408, %v392
  %v410 = vpop.permute.xlu0 %409
  %411 = vset.pattern.permute.xlu0 0
  %412 = vperm.xlu0 %411, %v393
  %v413 = vpop.permute.xlu0 %412
  %414 = vset.pattern.permute.xlu0 0
  %415 = vperm.xlu0 %414, %v394
  %v416 = vpop.permute.xlu0 %415
  %417 = vset.pattern.permute.xlu0 0
  %418 = vperm.xlu0 %417, %v395
  %v419 = vpop.permute.xlu0 %418
  %v420 = vlaneseq
  %v421 = vshrl.u32 %v420, 7
  %v422 = vsub.s32 %v18, %v421
  %v423 = vrot.slane %v404, %v422
  %v424 = vlaneseq
  %v425 = vshrl.u32 %v424, 7
  %v426 = vsub.s32 %v18, %v425
  %v427 = vrot.slane %v407, %v426
  %v428 = vlaneseq
  %v429 = vshrl.u32 %v428, 7
  %v430 = vsub.s32 %v18, %v429
  %v431 = vrot.slane %v410, %v430
  %v432 = vlaneseq
  %v433 = vshrl.u32 %v432, 7
  %v434 = vsub.s32 %v18, %v433
  %v435 = vrot.slane %v413, %v434
  %v436 = vlaneseq
  %v437 = vshrl.u32 %v436, 7
  %v438 = vsub.s32 %v18, %v437
  %v439 = vrot.slane %v416, %v438
  %v440 = vlaneseq
  %v441 = vshrl.u32 %v440, 7
  %v442 = vsub.s32 %v18, %v441
  %v443 = vrot.slane %v419, %v442
  %v444 = vsel %vm177, %v427, %v423
  %v445 = vsel %vm179, %v431, %v444
  %v446 = vsel %vm181, %v435, %v445
  %v447 = vsel %vm183, %v439, %v446
  %v448 = vsel %vm185, %v443, %v447
  %v450 = vsel %vm188, %v448, 0.0
  %451 = vadd.xlane.f32.xlu0 %v450
  %v452 = vpop.xlane.xlu0 %451
  %v453 = vmul.f32 %v277, %v277
  %v454 = vsel %vm188, %v453, 0.0
  %455 = vadd.xlane.f32.xlu0 %v454
  %v456 = vpop.xlane.xlu0 %455
  %v457 = vmul.f32 %v452, %v456
  %v458 = vrsqrt.pop %v457
  %v459 = vmul.f32 %v389, %v458
  %v460 = vand.u32 2147483647, %v459
  %461 = vst.msk [vmem:[%s4] sm:$0x3f] %vm194, %v460
  // Predicated region
  $region14: #{_forward_masked.1} parent=0 // pred_check
    _
  $region15: #{_forward_masked.1} parent=0 // pred_check_branch
    %463 = sbr.rel (0) target = $region17
  $region16: #{_forward_masked.1} parent=0 // pred_region
    _
  $region17: #{_forward_masked.1} parent=0 // pred_fallthru
    _
  // Predicated region
  $region18: #{_forward_masked.1} parent=0 // pred_check
    _
  $region19: #{_forward_masked.1} parent=0 // pred_check_branch
    %465 = sbr.rel (0) target = $region21
  $region20: #{_forward_masked.1} parent=0 // pred_region
    _
  $region21: #{_forward_masked.1} parent=0 // pred_fallthru
    _
  // Predicated region
  $region22: #{_forward_masked.1} parent=0 // pred_check
    _
  $region23: #{_forward_masked.1} parent=0 // pred_check_branch
    %467 = sbr.rel (0) target = $region25
  $region24: #{_forward_masked.1} parent=0 // pred_region
    _
  $region25: #{_forward_masked.1} parent=0 // pred_fallthru
    _
  // Predicated region
  $region26: #{_forward_masked.1} parent=0 // pred_check
    _
  $region27: #{_forward_masked.1} parent=0 // pred_check_branch
    %469 = sbr.rel (0) target = $region29
  $region28: #{_forward_masked.1} parent=0 // pred_region
    _
  $region29: #{_forward_masked.1} parent=0 // pred_fallthru
    _

</llo_original>
